<compile_context>
chip_gen: v6e
topology: v6e:2x2x1
jax: 0.10.0
libtpu: 0.0.40
codegen_flags: <defaults>
</compile_context>

<pallas_src>
import functools

import jax
import jax.numpy as jnp
from jax.experimental import pallas as pl
from jax.experimental.pallas import tpu as pltpu


def _round_up(x: int, m: int) -> int:
    return ((x + m - 1) // m) * m


def _round_down(x: int, m: int) -> int:
    return (x // m) * m


def _ffn_kernel(x_ref, w1_ref, bias_ref, w2_ref, o_ref, *scratch,
                n_steps, tn, e_valid, mask_tail, cdt):
    """One (row-tile i, hidden-chunk n) grid step.

    x_ref:    (tm, E)   activation tile (stored dtype; cast to `cdt` for the MXU)
    w1_ref:   (E, tn)   columns [n*tn, (n+1)*tn) of W1     (full (E, E) when n_steps == 1)
    w2_ref:   (tn, E)   rows    [n*tn, (n+1)*tn) of W2     (full (E, E) when n_steps == 1)
    bias_ref: (2, E_pad) f32, row 0 = b1, row 1 = b2 (grid-invariant)
    o_ref:    (tm, E)   output tile
    scratch:  (acc,) f32 (tm, E) accumulator -- only present when n_steps > 1
    """
    x = x_ref[...].astype(cdt)
    w1 = w1_ref[...].astype(cdt)
    h = jnp.dot(x, w1, preferred_element_type=jnp.float32)

    if n_steps == 1:
        # Weight-resident path: both matmuls in one grid step.
        h = jnp.maximum(h + bias_ref[0:1, :], 0.0)         # bias + ReLU on the f32 accumulator
        # Dropout(p): inference-mode identity.
        # TODO(synk): training-mode dropout would need pltpu.prng_seed + pltpu.prng_random_bits
        # masking and 1/(1-p) scaling; omitted (eval semantics).
        y = jnp.dot(h.astype(cdt), w2_ref[...].astype(cdt),
                    preferred_element_type=jnp.float32)
        o_ref[...] = (y + bias_ref[1:2, 0:e_valid]).astype(o_ref.dtype)
        return

    # Weight-streaming path: acc += relu(x @ W1[:, chunk] + b1[chunk]) @ W2[chunk, :]
    acc_ref = scratch[0]
    n = pl.program_id(1)

    @pl.when(n == 0)
    def _():
        acc_ref[...] = jnp.zeros_like(acc_ref)

    start = pl.multiple_of(n * tn, tn)
    h = jnp.maximum(h + bias_ref[0:1, pl.ds(start, tn)], 0.0)

    w2 = w2_ref[...].astype(cdt)
    if mask_tail:
        # Tail hidden chunk reads past E: zero BOTH the h columns and the W2 rows in the
        # OOB region so unspecified padding (possibly NaN) never reaches the accumulator.
        hid_c = n * tn + jax.lax.broadcasted_iota(jnp.int32, h.shape, 1)
        h = jnp.where(hid_c < e_valid, h, 0.0)
        hid_r = n * tn + jax.lax.broadcasted_iota(jnp.int32, w2.shape, 0)
        w2 = jnp.where(hid_r < e_valid, w2, 0)

    # Dropout(p): inference-mode identity (see TODO above).
    acc_ref[...] += jnp.dot(h.astype(cdt), w2, preferred_element_type=jnp.float32)

    @pl.when(n == n_steps - 1)
    def _():
        o_ref[...] = (acc_ref[...] + bias_ref[1:2, 0:e_valid]).astype(o_ref.dtype)


def transformer_ffn(x, w1, b1, w2, b2, *, tm=1024, tn=None,
                    compute_dtype=None, out_dtype=None):
    """Transformer FFN: Linear -> ReLU -> Dropout(eval) -> Linear.

    x: [B, S, E]; w1/w2: [E, E] stored (in_features, out_features) i.e. transposed
    PyTorch Linear.weight; b1/b2: [E].

    compute_dtype: dtype fed to the MXU (e.g. jnp.bfloat16 on v6e/v7x); cast happens
      inside the kernel (no extra HBM pass), accumulation is always f32.
    out_dtype: writeback dtype (default x.dtype); pass bf16 with compute_dtype=bf16 to
      cut output HBM traffic.
    tn: hidden-chunk width for the weight-streaming path (None = auto).
    """
    B, S, E = x.shape
    M = B * S
    out_dt = jnp.dtype(out_dtype) if out_dtype is not None else jnp.dtype(x.dtype)
    cdt = jnp.dtype(compute_dtype) if compute_dtype is not None else jnp.dtype(x.dtype)

    x_bytes = jnp.dtype(x.dtype).itemsize
    o_bytes = out_dt.itemsize
    w_bytes = jnp.dtype(w1.dtype).itemsize

    # --- per-generation VMEM budget (~80% of physical, 32 MiB floor) --------------------
    try:
        phys_vmem = int(pltpu.get_tpu_info().vmem_capacity_bytes)
    except Exception:
        phys_vmem = 64 << 20                       # conservative: v7x per-TC VMEM
    vmem_cap = max(32 << 20, int(phys_vmem * 0.8))

    # --- hidden-dim (contraction) tiling -------------------------------------------------
    weight_budget = vmem_cap // 2                  # leave at least half for activation tiles
    if tn is None:
        if 2 * E * E * w_bytes <= weight_budget:
            tn_eff = E                             # weight-resident, single hidden step
        else:
            # stream W1/W2 in 256-aligned hidden chunks (fills 256x256 MXU on v6e/v7x),
            # double-buffered -> 4*E*tn*w_bytes of VMEM.
            tn_eff = _round_down(weight_budget // (4 * E * w_bytes), 256)
            tn_eff = max(256, min(tn_eff, _round_up(E, 256)))
    else:
        tn_eff = min(int(tn), E)

    tiled = tn_eff < E
    n_steps = pl.cdiv(E, tn_eff) if tiled else 1
    mask_tail = tiled and (E % tn_eff != 0)

    # --- row tile: as large as VMEM allows, but keep >= 2 "parallel" steps for v7x -------
    per_row = E * (2 * x_bytes + 2 * o_bytes) + (E * 4 if tiled else 0)   # x/out dbl-buf + acc
    if tiled:
        w_foot = 2 * (E * tn_eff + tn_eff * E) * w_bytes                  # double-buffered chunks
    else:
        w_foot = 2 * E * E * w_bytes                                      # single-buffered resident
    bias_foot = 2 * _round_up(E, 128) * 4
    slack = 2 << 20

    avail = max(vmem_cap - w_foot - bias_foot - slack, 8 * per_row)
    tm_cap = max(8, _round_down(avail // per_row, 8))
    tm_eff = max(8, min(_round_up(tm, 8), _round_up(M, 8), tm_cap))
    if pl.cdiv(M, tm_eff) < 2 and M >= 512:        # keep the parallel axis shardable on v7x
        tm_eff = max(8, _round_up(pl.cdiv(M, 2), 8))
    grid_m = pl.cdiv(M, tm_eff)

    # --- inputs: no wrapper-side pad / astype passes over HBM ----------------------------
    x2d = x.reshape(M, E)                          # contiguous reshape: no copy
    e_pad = n_steps * tn_eff if mask_tail else E
    biases = jnp.concatenate([b1.reshape(1, E), b2.reshape(1, E)], axis=0).astype(jnp.float32)
    if e_pad != E:                                 # tiny pad: keeps in-kernel b1 slices in-bounds
        biases = jnp.pad(biases, ((0, 0), (0, e_pad - E)))

    kernel = functools.partial(_ffn_kernel, n_steps=n_steps, tn=tn_eff,
                               e_valid=E, mask_tail=mask_tail, cdt=cdt)

    invariant = pl.Buffered(1)                     # grid-invariant blocks: one VMEM buffer
    if tiled:
        w1_spec = pl.BlockSpec((E, tn_eff), lambda i, n: (0, n))
        w2_spec = pl.BlockSpec((tn_eff, E), lambda i, n: (n, 0))
        scratch = [pltpu.VMEM((tm_eff, E), jnp.float32)]
    else:
        w1_spec = pl.BlockSpec((E, E), lambda i, n: (0, 0), pipeline_mode=invariant)
        w2_spec = pl.BlockSpec((E, E), lambda i, n: (0, 0), pipeline_mode=invariant)
        scratch = []

    vmem_needed = tm_eff * per_row + w_foot + bias_foot + slack
    vmem_limit = int(min(max(vmem_needed, 32 << 20), vmem_cap))

    cost = pl.CostEstimate(
        flops=4 * M * E * E,                       # two (M,E) x (E,E) matmuls
        transcendentals=0,
        bytes_accessed=M * E * (x_bytes + o_bytes) + 2 * E * E * w_bytes + 2 * E * 4,
    )

    out = pl.pallas_call(
        kernel,
        out_shape=jax.ShapeDtypeStruct((M, E), out_dt),
        grid_spec=pltpu.PrefetchScalarGridSpec(
            num_scalar_prefetch=0,
            grid=(grid_m, n_steps),
            in_specs=[
                pl.BlockSpec((tm_eff, E), lambda i, n: (i, 0)),                           # x tile
                w1_spec,                                                                  # W1 chunk
                pl.BlockSpec((2, e_pad), lambda i, n: (0, 0), pipeline_mode=invariant),   # [b1; b2]
                w2_spec,                                                                  # W2 chunk
            ],
            out_specs=pl.BlockSpec((tm_eff, E), lambda i, n: (i, 0)),
            scratch_shapes=scratch,
        ),
        compiler_params=pltpu.CompilerParams(
            dimension_semantics=("parallel", "arbitrary"),
            vmem_limit_bytes=vmem_limit,
        ),
        cost_estimate=cost,
    )(x2d, w1, biases, w2)

    return out.reshape(B, S, E)


if __name__ == "__main__":
    def ffn_ref(x, w1, b1, w2, b2):
        B, S, E = x.shape
        h = jnp.maximum(x.reshape(-1, E) @ w1 + b1, 0.0)
        return (h @ w2 + b2).reshape(B, S, E)

    # ---- config 1: E=128, f32 (weight-resident path, partial edge row tile) -------------
    batch, seq, emb = 2, 9, 128      # M = 18: exercises the OOB-masked edge row block
    dropout_p = 0.1                  # inference: identity
    k = jax.random.split(jax.random.PRNGKey(0), 5)
    x = jax.random.normal(k[0], (batch, seq, emb), dtype=jnp.float32)
    w1 = jax.random.normal(k[1], (emb, emb), dtype=jnp.float32) * 0.02
    b1 = jax.random.normal(k[2], (emb,), dtype=jnp.float32) * 0.02
    w2 = jax.random.normal(k[3], (emb, emb), dtype=jnp.float32) * 0.02
    b2 = jax.random.normal(k[4], (emb,), dtype=jnp.float32) * 0.02
    ref = ffn_ref(x, w1, b1, w2, b2)

    y = transformer_ffn(x, w1, b1, w2, b2)
    jax.block_until_ready(y)
    assert y.shape == (batch, seq, emb)
    assert jnp.allclose(y, ref, atol=5e-4, rtol=5e-4), "f32 resident kernel mismatch"

    # bf16 compute + bf16 writeback (production config on v6e/v7x)
    y_bf16 = transformer_ffn(x, w1, b1, w2, b2,
                             compute_dtype=jnp.bfloat16, out_dtype=jnp.bfloat16)
    jax.block_until_ready(y_bf16)
    assert y_bf16.dtype == jnp.bfloat16
    assert jnp.allclose(y_bf16.astype(jnp.float32), ref, atol=8e-2, rtol=8e-2), \
        "bf16 kernel mismatch"

    # ---- config 2: force the weight-streaming (hidden-chunk) path, no tail --------------
    emb2 = 256
    k = jax.random.split(jax.random.PRNGKey(1), 5)
    x2 = jax.random.normal(k[0], (batch, seq, emb2), dtype=jnp.float32)
    w1b = jax.random.normal(k[1], (emb2, emb2), dtype=jnp.float32) * 0.02
    b1b = jax.random.normal(k[2], (emb2,), dtype=jnp.float32) * 0.02
    w2b = jax.random.normal(k[3], (emb2, emb2), dtype=jnp.float32) * 0.02
    b2b = jax.random.normal(k[4], (emb2,), dtype=jnp.float32) * 0.02
    y2 = transformer_ffn(x2, w1b, b1b, w2b, b2b, tn=128)     # 2 hidden chunks
    jax.block_until_ready(y2)
    assert jnp.allclose(y2, ffn_ref(x2, w1b, b1b, w2b, b2b), atol=1e-3, rtol=1e-3), \
        "tiled (hidden-chunk) kernel mismatch"

    # ---- config 3: hidden-chunk path with a masked tail chunk ---------------------------
    emb3 = 384
    k = jax.random.split(jax.random.PRNGKey(2), 5)
    x3 = jax.random.normal(k[0], (batch, seq, emb3), dtype=jnp.float32)
    w1c = jax.random.normal(k[1], (emb3, emb3), dtype=jnp.float32) * 0.02
    b1c = jax.random.normal(k[2], (emb3,), dtype=jnp.float32) * 0.02
    w2c = jax.random.normal(k[3], (emb3, emb3), dtype=jnp.float32) * 0.02
    b2c = jax.random.normal(k[4], (emb3,), dtype=jnp.float32) * 0.02
    y3 = transformer_ffn(x3, w1c, b1c, w2c, b2c, tn=256)     # cdiv(384,256)=2, tail masked
    jax.block_until_ready(y3)
    assert jnp.allclose(y3, ffn_ref(x3, w1c, b1c, w2c, b2c), atol=1e-3, rtol=1e-3), \
        "masked-tail kernel mismatch"

    print("KERNEL_OK")
</pallas_src>

<mosaic_0001>
module attributes {stable_mosaic.version = 11 : i64} {
  func.func @_ffn_kernel(%arg0: i32, %arg1: i32, %arg2: memref<24x128xf32, #tpu.memory_space<vmem>>, %arg3: memref<128x128xf32, #tpu.memory_space<vmem>>, %arg4: memref<2x128xf32, #tpu.memory_space<vmem>>, %arg5: memref<128x128xf32, #tpu.memory_space<vmem>>, %arg6: memref<24x128xf32, #tpu.memory_space<vmem>>) attributes {dimension_semantics = [#tpu.dimension_semantics<parallel>, #tpu.dimension_semantics<arbitrary>], iteration_bounds = array<i64: 1, 1>, scalar_prefetch = 0 : i64, scratch_operands = 0 : i64, tpu.core_type = #tpu.core_type<tc>, window_params = [{transform_indices = @transform_0, window_bounds = array<i64: 24, 128>}, {pipeline_mode = #tpu.pipeline_mode<synchronous>, transform_indices = @transform_1, window_bounds = array<i64: 128, 128>}, {pipeline_mode = #tpu.pipeline_mode<synchronous>, transform_indices = @transform_2, window_bounds = array<i64: 2, 128>}, {pipeline_mode = #tpu.pipeline_mode<synchronous>, transform_indices = @transform_3, window_bounds = array<i64: 128, 128>}, {transform_indices = @transform_4, window_bounds = array<i64: 24, 128>}]} {
    %c0 = arith.constant 0 : index
    %c0_0 = arith.constant 0 : index
    %0 = vector.load %arg2[%c0, %c0_0] : memref<24x128xf32, #tpu.memory_space<vmem>>, vector<24x128xf32>
    %c0_1 = arith.constant 0 : index
    %c0_2 = arith.constant 0 : index
    %1 = vector.load %arg3[%c0_1, %c0_2] : memref<128x128xf32, #tpu.memory_space<vmem>>, vector<128x128xf32>
    %cst = arith.constant dense<0.000000e+00> : vector<24x128xf32>
    %2 = tpu.matmul %0, %1, %cst {dimension_numbers = #tpu.dot_dimension_numbers<[1], [0], [0], [1], [0, 0, 1, 1], [], []>} : vector<24x128xf32>, vector<128x128xf32>, vector<24x128xf32> -> vector<24x128xf32>
    %c0_3 = arith.constant 0 : index
    %c0_4 = arith.constant 0 : index
    %3 = vector.load %arg4[%c0_3, %c0_4] : memref<2x128xf32, #tpu.memory_space<vmem>>, vector<1x128xf32>
    %4 = vector.broadcast %3 : vector<1x128xf32> to vector<24x128xf32>
    %5 = arith.addf %2, %4 : vector<24x128xf32>
    %cst_5 = arith.constant 0.000000e+00 : f32
    %6 = vector.broadcast %cst_5 : f32 to vector<24x128xf32>
    %7 = arith.maximumf %5, %6 : vector<24x128xf32>
    %c0_6 = arith.constant 0 : index
    %c0_7 = arith.constant 0 : index
    %8 = vector.load %arg5[%c0_6, %c0_7] : memref<128x128xf32, #tpu.memory_space<vmem>>, vector<128x128xf32>
    %cst_8 = arith.constant dense<0.000000e+00> : vector<24x128xf32>
    %9 = tpu.matmul %7, %8, %cst_8 {dimension_numbers = #tpu.dot_dimension_numbers<[1], [0], [0], [1], [0, 0, 1, 1], [], []>} : vector<24x128xf32>, vector<128x128xf32>, vector<24x128xf32> -> vector<24x128xf32>
    %c1 = arith.constant 1 : index
    %c0_9 = arith.constant 0 : index
    %10 = vector.load %arg4[%c1, %c0_9] : memref<2x128xf32, #tpu.memory_space<vmem>>, vector<1x128xf32>
    %11 = vector.broadcast %10 : vector<1x128xf32> to vector<24x128xf32>
    %12 = arith.addf %9, %11 : vector<24x128xf32>
    %c0_10 = arith.constant 0 : index
    %c0_11 = arith.constant 0 : index
    %13 = vector.load %arg6[%c0_10, %c0_11] : memref<24x128xf32, #tpu.memory_space<vmem>>, vector<24x128xf32>
    tpu.vector_store %arg6[%c0_10, %c0_11], %12 {strides = array<i32>} : memref<24x128xf32, #tpu.memory_space<vmem>>, vector<24x128xf32>,
    return
  }
  func.func @transform_0(%arg0: i32, %arg1: i32) -> (i32, i32) {
    %c0_i32 = arith.constant 0 : i32
    %c0_i32_0 = arith.constant 0 : i32
    return %arg0, %c0_i32 : i32, i32
  }
  func.func @transform_1(%arg0: i32, %arg1: i32) -> (i32, i32) {
    %c0_i32 = arith.constant 0 : i32
    %c0_i32_0 = arith.constant 0 : i32
    %c0_i32_1 = arith.constant 0 : i32
    return %c0_i32, %c0_i32_0 : i32, i32
  }
  func.func @transform_2(%arg0: i32, %arg1: i32) -> (i32, i32) {
    %c0_i32 = arith.constant 0 : i32
    %c0_i32_0 = arith.constant 0 : i32
    %c0_i32_1 = arith.constant 0 : i32
    return %c0_i32, %c0_i32_0 : i32, i32
  }
  func.func @transform_3(%arg0: i32, %arg1: i32) -> (i32, i32) {
    %c0_i32 = arith.constant 0 : i32
    %c0_i32_0 = arith.constant 0 : i32
    %c0_i32_1 = arith.constant 0 : i32
    return %c0_i32, %c0_i32_0 : i32, i32
  }
  func.func @transform_4(%arg0: i32, %arg1: i32) -> (i32, i32) {
    %c0_i32 = arith.constant 0 : i32
    %c0_i32_0 = arith.constant 0 : i32
    return %arg0, %c0_i32 : i32, i32
  }
}

</mosaic_0001>

<llo_original>
// kernel: tpu_custom_call.1
$region0: #{tpu_custom_call.1}
  #allocation0 [shape = 'u32[]', space=smem, size = 0x4, offset = 0x4, fixed_abs, tag = 'smem constant byte address 0x4 - core index']
  #allocation1 [shape = 'u32[144,128]{1,0:T(1,128)}', space=vmem, size = 0x12000, scoped, tag = 'internal scratch']
  %s0 = inlined_call_operand.hbm [shape: f32[18,128], index: 0, kind: input, shape index: {}]
  %s1 = inlined_call_operand.hbm [shape: f32[128,128], index: 1, kind: input, shape index: {}]
  %s2 = inlined_call_operand.vmem [shape: f32[2,128], index: 2, kind: input, shape index: {}]
  %s3 = inlined_call_operand.hbm [shape: f32[128,128], index: 3, kind: input, shape index: {}]
  %s4 = inlined_call_operand.hbm [shape: f32[18,128], index: 4, kind: output, shape index: {}]
  %s5 = sld [smem:[#allocation0]]
  $region38: #{tpu_custom_call.1} parent=0
    _
  %s7 = ssub.s32 1, %s5
  %s8 = scalar_select 0, %s7, %s5
  $region1: #{tpu_custom_call.1} parent=0
    #allocation2 [shape = 'u8[12288]{0}', space=vmem, size = 0x3000, scoped, tag = 'input window, operand 0, single buffered']
    #allocation3 [shape = 's32[1]{0}', space=sflag, size = 0x4, scoped, tag = 'scoped memory for tpu_custom_call.1']
    #allocation4 [shape = 's32[1]{0}', space=sflag, size = 0x4, scoped, tag = 'scoped memory for tpu_custom_call.1']
    #allocation5 [shape = 'u8[65536]{0}', space=vmem, size = 0x10000, scoped, tag = 'input window, operand 1, single buffered']
    #allocation6 [shape = 's32[1]{0}', space=sflag, size = 0x4, scoped, tag = 'scoped memory for tpu_custom_call.1']
    #allocation7 [shape = 'u8[65536]{0}', space=vmem, size = 0x10000, scoped, tag = 'input window, operand 3, single buffered']
    #allocation8 [shape = 'u8[12288]{0}', space=vmem, size = 0x3000, scoped, tag = 'output window, operand 0, single buffered']
    %9 = vsyncpa [#allocation3], 0
    %10 = vsyncpa [#allocation6], 0
    %11 = vsyncpa [#allocation4], 0
    // Predicated region
    $region2: #{tpu_custom_call.1} parent=1 // pred_check
      _
    $region3: #{tpu_custom_call.1} parent=1 // pred_check_branch
      %13 = sbr.rel (0) target = $region5
    $region4: #{tpu_custom_call.1} parent=1 // pred_region
      %s15 = ssub.s32 384, 384
      %16 = vsyncadd [#allocation3], %s15
      %s17 = sshll.u32 [#allocation2], 4
      %s18 = int_to_ptr.vmem [resolvable:$true] %s17
      %23 = dma.hbm_to_vmem [thread:$0]  %s0, 384, %s18, [#allocation3], 128, 128, 8
    $region5: #{tpu_custom_call.1} parent=1 // pred_fallthru
      _
    // Predicated region
    $region6: #{tpu_custom_call.1} parent=1 // pred_check
      _
    $region7: #{tpu_custom_call.1} parent=1 // pred_check_branch
      %25 = sbr.rel (0) target = $region9
    $region8: #{tpu_custom_call.1} parent=1 // pred_region
      %s27 = ssub.s32 2048, 2048
      %28 = vsyncadd [#allocation6], %s27
      %s29 = sshll.u32 [#allocation5], 4
      %s30 = int_to_ptr.vmem [resolvable:$true] %s29
      %35 = dma.hbm_to_vmem [thread:$0]  %s1, 2048, %s30, [#allocation6], 128, 128, 8
    $region9: #{tpu_custom_call.1} parent=1 // pred_fallthru
      _
    // Predicated region
    $region10: #{tpu_custom_call.1} parent=1 // pred_check
      _
    $region11: #{tpu_custom_call.1} parent=1 // pred_check_branch
      %37 = sbr.rel (0) target = $region13
    $region12: #{tpu_custom_call.1} parent=1 // pred_region
      _
    $region13: #{tpu_custom_call.1} parent=1 // pred_fallthru
      _
    // Predicated region
    $region14: #{tpu_custom_call.1} parent=1 // pred_check
      _
    $region15: #{tpu_custom_call.1} parent=1 // pred_check_branch
      %39 = sbr.rel (0) target = $region17
    $region16: #{tpu_custom_call.1} parent=1 // pred_region
      %s41 = ssub.s32 2048, 2048
      %42 = vsyncadd [#allocation6], %s41
      %s43 = sshll.u32 [#allocation7], 4
      %s44 = int_to_ptr.vmem [resolvable:$true] %s43
      %49 = dma.hbm_to_vmem [thread:$0]  %s3, 2048, %s44, [#allocation6], 128, 128, 8
    $region17: #{tpu_custom_call.1} parent=1 // pred_fallthru
      _
    // Predicated region
    $region18: #{tpu_custom_call.1} parent=1 // pred_check
      _
    $region19: #{tpu_custom_call.1} parent=1 // pred_check_branch
      %51 = sbr.rel (0) target = $region21
    $region20: #{tpu_custom_call.1} parent=1 // pred_region
      %52 = dma.done [#allocation3], 384
    $region21: #{tpu_custom_call.1} parent=1 // pred_fallthru
      _
    // Predicated region
    $region22: #{tpu_custom_call.1} parent=1 // pred_check
      _
    $region23: #{tpu_custom_call.1} parent=1 // pred_check_branch
      %54 = sbr.rel (0) target = $region25
    $region24: #{tpu_custom_call.1} parent=1 // pred_region
      %55 = dma.done [#allocation6], 2048
    $region25: #{tpu_custom_call.1} parent=1 // pred_fallthru
      _
    // Predicated region
    $region26: #{tpu_custom_call.1} parent=1 // pred_check
      _
    $region27: #{tpu_custom_call.1} parent=1 // pred_check_branch
      %57 = sbr.rel (0) target = $region29
    $region28: #{tpu_custom_call.1} parent=1 // pred_region
      %58 = dma.done [#allocation6], 2048
    $region29: #{tpu_custom_call.1} parent=1 // pred_fallthru
      _
    %v59 = vld [vmem:[#allocation2] sm:$0xff]
    %v60 = vld [vmem:[#allocation2 + $0x8] sm:$0xff]
    %v61 = vld [vmem:[#allocation2 + $0x10] sm:$0xff]
    %v62 = vld [vmem:[#allocation5] sm:$0xff]
    %v63 = vld [vmem:[#allocation5 + $0x8] sm:$0xff]
    %v64 = vld [vmem:[#allocation5 + $0x10] sm:$0xff]
    %v65 = vld [vmem:[#allocation5 + $0x18] sm:$0xff]
    %v66 = vld [vmem:[#allocation5 + $0x20] sm:$0xff]
    %v67 = vld [vmem:[#allocation5 + $0x28] sm:$0xff]
    %v68 = vld [vmem:[#allocation5 + $0x30] sm:$0xff]
    %v69 = vld [vmem:[#allocation5 + $0x38] sm:$0xff]
    %v70 = vld [vmem:[#allocation5 + $0x40] sm:$0xff]
    %v71 = vld [vmem:[#allocation5 + $0x48] sm:$0xff]
    %v72 = vld [vmem:[#allocation5 + $0x50] sm:$0xff]
    %v73 = vld [vmem:[#allocation5 + $0x58] sm:$0xff]
    %v74 = vld [vmem:[#allocation5 + $0x60] sm:$0xff]
    %v75 = vld [vmem:[#allocation5 + $0x68] sm:$0xff]
    %v76 = vld [vmem:[#allocation5 + $0x70] sm:$0xff]
    %v77 = vld [vmem:[#allocation5 + $0x78] sm:$0xff]
    %v78 = vld [vmem:[%s2] sm:$0x1]
    %v79 = vlaneseq
    %v80 = vshrl.u32 %v79, 7
    %v81 = vsub.s32 0, %v80
    %v82 = vrot.slane %v78, %v81
    %83 = vmatprep.subr.mxu0 0.0
    %84 = vmatpush1.msra.mxu0 %v77
    %85 = vmatprep.subr.mxu0 0.0
    %86 = vmatpush1.msra.mxu0 %v76
    %87 = vmatprep.subr.mxu0 0.0
    %88 = vmatpush1.msra.mxu0 %v75
    %89 = vmatprep.subr.mxu0 0.0
    %90 = vmatpush1.msra.mxu0 %v74
    %91 = vmatprep.subr.mxu0 0.0
    %92 = vmatpush1.msra.mxu0 %v73
    %93 = vmatprep.subr.mxu0 0.0
    %94 = vmatpush1.msra.mxu0 %v72
    %95 = vmatprep.subr.mxu0 0.0
    %96 = vmatpush1.msra.mxu0 %v71
    %97 = vmatprep.subr.mxu0 0.0
    %98 = vmatpush1.msra.mxu0 %v70
    %99 = vmatprep.subr.mxu0 0.0
    %100 = vmatpush1.msra.mxu0 %v69
    %101 = vmatprep.subr.mxu0 0.0
    %102 = vmatpush1.msra.mxu0 %v68
    %103 = vmatprep.subr.mxu0 0.0
    %104 = vmatpush1.msra.mxu0 %v67
    %105 = vmatprep.subr.mxu0 0.0
    %106 = vmatpush1.msra.mxu0 %v66
    %107 = vmatprep.subr.mxu0 0.0
    %108 = vmatpush1.msra.mxu0 %v65
    %109 = vmatprep.subr.mxu0 0.0
    %110 = vmatpush1.msra.mxu0 %v64
    %111 = vmatprep.subr.mxu0 0.0
    %112 = vmatpush1.msra.mxu0 %v63
    %113 = vmatprep.subr.mxu0 0.0
    %114 = vmatpush1.msra.mxu0 %v62
    %115 = vmatprep.subr.mxu0 0.0
    %116 = vmatpush2.msra.mxu0 0.0
    %117 = vmatprep.subr.mxu0 0.0
    %118 = vmatpush2.msra.mxu0 0.0
    %119 = vmatprep.subr.mxu0 0.0
    %120 = vmatpush2.msra.mxu0 0.0
    %121 = vmatprep.subr.mxu0 0.0
    %122 = vmatpush2.msra.mxu0 0.0
    %123 = vmatprep.subr.mxu0 0.0
    %124 = vmatpush2.msra.mxu0 0.0
    %125 = vmatprep.subr.mxu0 0.0
    %126 = vmatpush2.msra.mxu0 0.0
    %127 = vmatprep.subr.mxu0 0.0
    %128 = vmatpush2.msra.mxu0 0.0
    %129 = vmatprep.subr.mxu0 0.0
    %130 = vmatpush2.msra.mxu0 0.0
    %131 = vmatprep.subr.mxu0 0.0
    %132 = vmatpush2.msra.mxu0 0.0
    %133 = vmatprep.subr.mxu0 0.0
    %134 = vmatpush2.msra.mxu0 0.0
    %135 = vmatprep.subr.mxu0 0.0
    %136 = vmatpush2.msra.mxu0 0.0
    %137 = vmatprep.subr.mxu0 0.0
    %138 = vmatpush2.msra.mxu0 0.0
    %139 = vmatprep.subr.mxu0 0.0
    %140 = vmatpush2.msra.mxu0 0.0
    %141 = vmatprep.subr.mxu0 0.0
    %142 = vmatpush2.msra.mxu0 0.0
    %143 = vmatprep.subr.mxu0 0.0
    %144 = vmatpush2.msra.mxu0 0.0
    %145 = vmatprep.subr.mxu0 0.0
    %146 = vmatpush2.msra.mxu0 0.0
    %147 = vmatprep.mubr.f32.mxu0 0.0
    %148 = vmatmul.mubr.f32.gmra.mxu0 %v59
    %v149 = vpop.f32.mrf.mxu0
    %v150 = vadd.f32 %v82, %v149
    %v151 = vpop.f32.mrf.mxu0
    %152 = vmatprep.mubr.f32.mxu0 0.0
    %153 = vmatmul.mubr.f32.gmra.mxu0 %v60
    %v154 = vpop.f32.mrf.mxu0
    %v155 = vadd.f32 %v82, %v154
    %v156 = vpop.f32.mrf.mxu0
    %157 = vmatprep.mubr.f32.mxu0 0.0
    %158 = vmatmul.mubr.f32.gmra.mxu0 %v61
    %v159 = vpop.f32.mrf.mxu0
    %v160 = vadd.f32 %v82, %v159
    %v161 = vpop.f32.mrf.mxu0
    %162 = vdwg.mxu0
    %v163 = vmax.f32 %v150, 0.0
    %v164 = vmax.f32 %v155, 0.0
    %v165 = vmax.f32 %v160, 0.0
    %v166 = vld [vmem:[#allocation7] sm:$0xff]
    %v167 = vld [vmem:[#allocation7 + $0x8] sm:$0xff]
    %v168 = vld [vmem:[#allocation7 + $0x10] sm:$0xff]
    %v169 = vld [vmem:[#allocation7 + $0x18] sm:$0xff]
    %v170 = vld [vmem:[#allocation7 + $0x20] sm:$0xff]
    %v171 = vld [vmem:[#allocation7 + $0x28] sm:$0xff]
    %v172 = vld [vmem:[#allocation7 + $0x30] sm:$0xff]
    %v173 = vld [vmem:[#allocation7 + $0x38] sm:$0xff]
    %v174 = vld [vmem:[#allocation7 + $0x40] sm:$0xff]
    %v175 = vld [vmem:[#allocation7 + $0x48] sm:$0xff]
    %v176 = vld [vmem:[#allocation7 + $0x50] sm:$0xff]
    %v177 = vld [vmem:[#allocation7 + $0x58] sm:$0xff]
    %v178 = vld [vmem:[#allocation7 + $0x60] sm:$0xff]
    %v179 = vld [vmem:[#allocation7 + $0x68] sm:$0xff]
    %v180 = vld [vmem:[#allocation7 + $0x70] sm:$0xff]
    %v181 = vld [vmem:[#allocation7 + $0x78] sm:$0xff]
    %v182 = vld [vmem:[%s2 + $0x1] sm:$0x1]
    %v183 = vlaneseq
    %v184 = vshrl.u32 %v183, 7
    %v185 = vsub.s32 0, %v184
    %v186 = vrot.slane %v182, %v185
    %187 = vmatprep.subr.mxu0 0.0
    %188 = vmatpush1.msra.mxu0 %v181
    %189 = vmatprep.subr.mxu0 0.0
    %190 = vmatpush1.msra.mxu0 %v180
    %191 = vmatprep.subr.mxu0 0.0
    %192 = vmatpush1.msra.mxu0 %v179
    %193 = vmatprep.subr.mxu0 0.0
    %194 = vmatpush1.msra.mxu0 %v178
    %195 = vmatprep.subr.mxu0 0.0
    %196 = vmatpush1.msra.mxu0 %v177
    %197 = vmatprep.subr.mxu0 0.0
    %198 = vmatpush1.msra.mxu0 %v176
    %199 = vmatprep.subr.mxu0 0.0
    %200 = vmatpush1.msra.mxu0 %v175
    %201 = vmatprep.subr.mxu0 0.0
    %202 = vmatpush1.msra.mxu0 %v174
    %203 = vmatprep.subr.mxu0 0.0
    %204 = vmatpush1.msra.mxu0 %v173
    %205 = vmatprep.subr.mxu0 0.0
    %206 = vmatpush1.msra.mxu0 %v172
    %207 = vmatprep.subr.mxu0 0.0
    %208 = vmatpush1.msra.mxu0 %v171
    %209 = vmatprep.subr.mxu0 0.0
    %210 = vmatpush1.msra.mxu0 %v170
    %211 = vmatprep.subr.mxu0 0.0
    %212 = vmatpush1.msra.mxu0 %v169
    %213 = vmatprep.subr.mxu0 0.0
    %214 = vmatpush1.msra.mxu0 %v168
    %215 = vmatprep.subr.mxu0 0.0
    %216 = vmatpush1.msra.mxu0 %v167
    %217 = vmatprep.subr.mxu0 0.0
    %218 = vmatpush1.msra.mxu0 %v166
    %219 = vmatprep.subr.mxu0 0.0
    %220 = vmatpush2.msra.mxu0 0.0
    %221 = vmatprep.subr.mxu0 0.0
    %222 = vmatpush2.msra.mxu0 0.0
    %223 = vmatprep.subr.mxu0 0.0
    %224 = vmatpush2.msra.mxu0 0.0
    %225 = vmatprep.subr.mxu0 0.0
    %226 = vmatpush2.msra.mxu0 0.0
    %227 = vmatprep.subr.mxu0 0.0
    %228 = vmatpush2.msra.mxu0 0.0
    %229 = vmatprep.subr.mxu0 0.0
    %230 = vmatpush2.msra.mxu0 0.0
    %231 = vmatprep.subr.mxu0 0.0
    %232 = vmatpush2.msra.mxu0 0.0
    %233 = vmatprep.subr.mxu0 0.0
    %234 = vmatpush2.msra.mxu0 0.0
    %235 = vmatprep.subr.mxu0 0.0
    %236 = vmatpush2.msra.mxu0 0.0
    %237 = vmatprep.subr.mxu0 0.0
    %238 = vmatpush2.msra.mxu0 0.0
    %239 = vmatprep.subr.mxu0 0.0
    %240 = vmatpush2.msra.mxu0 0.0
    %241 = vmatprep.subr.mxu0 0.0
    %242 = vmatpush2.msra.mxu0 0.0
    %243 = vmatprep.subr.mxu0 0.0
    %244 = vmatpush2.msra.mxu0 0.0
    %245 = vmatprep.subr.mxu0 0.0
    %246 = vmatpush2.msra.mxu0 0.0
    %247 = vmatprep.subr.mxu0 0.0
    %248 = vmatpush2.msra.mxu0 0.0
    %249 = vmatprep.subr.mxu0 0.0
    %250 = vmatpush2.msra.mxu0 0.0
    %251 = vmatprep.mubr.f32.mxu0 0.0
    %252 = vmatmul.mubr.f32.gmra.mxu0 %v163
    %v253 = vpop.f32.mrf.mxu0
    %v254 = vadd.f32 %v186, %v253
    %v255 = vpop.f32.mrf.mxu0
    %256 = vmatprep.mubr.f32.mxu0 0.0
    %257 = vmatmul.mubr.f32.gmra.mxu0 %v164
    %v258 = vpop.f32.mrf.mxu0
    %v259 = vadd.f32 %v186, %v258
    %v260 = vpop.f32.mrf.mxu0
    %261 = vmatprep.mubr.f32.mxu0 0.0
    %262 = vmatmul.mubr.f32.gmra.mxu0 %v165
    %v263 = vpop.f32.mrf.mxu0
    %v264 = vadd.f32 %v186, %v263
    %v265 = vpop.f32.mrf.mxu0
    %266 = vdwg.mxu0
    %267 = vst [vmem:[#allocation8] sm:$0xff] %v254
    %268 = vst [vmem:[#allocation8 + $0x8] sm:$0xff] %v259
    %269 = vst [vmem:[#allocation8 + $0x10] sm:$0xff] %v264
    // Predicated region
    $region30: #{tpu_custom_call.1} parent=1 // pred_check
      _
    $region31: #{tpu_custom_call.1} parent=1 // pred_check_branch
      %271 = sbr.rel (0) target = $region33
    $region32: #{tpu_custom_call.1} parent=1 // pred_region
      %s273 = ssub.s32 384, 384
      %274 = vsyncadd [#allocation4], %s273
      %s275 = sshll.u32 [#allocation8], 4
      %s276 = int_to_ptr.vmem [resolvable:$true] %s275
      %281 = dma.vmem_to_hbm [thread:$0]  %s276, 384, %s4, [#allocation4], 128, 128, 8
    $region33: #{tpu_custom_call.1} parent=1 // pred_fallthru
      _
    // Predicated region
    $region34: #{tpu_custom_call.1} parent=1 // pred_check
      _
    $region35: #{tpu_custom_call.1} parent=1 // pred_check_branch
      %283 = sbr.rel (0) target = $region37
    $region36: #{tpu_custom_call.1} parent=1 // pred_region
      %284 = dma.done [#allocation4], 384
    $region37: #{tpu_custom_call.1} parent=1 // pred_fallthru
      _
    %285 = vsyncpa [#allocation3], 1
    %286 = vsyncpa [#allocation6], 1
    %287 = vsyncpa [#allocation4], 1

</llo_original>
